<compile_context>
chip_gen: v5e
topology: v5e:2x2
jax: 0.10.0
libtpu: 0.0.40
codegen_flags: <defaults>
</compile_context>

<pallas_src>
import functools

import jax
import jax.numpy as jnp
from jax import lax
from jax.experimental import pallas as pl
from jax.experimental.pallas import tpu as pltpu

_LANE = 128
_SUBLANE = 8


def _round_up(v, m):
    return ((v + m - 1) // m) * m


def _focal_loss_kernel(x_ref, t_ref, out_ref, *, gamma, alpha, hw,
                       block_rows, needs_mask):
    """One grid step: batch `b`, spatial chunk `j`.

    x_ref:   (1, 2, block_rows, 128) logits (channel planes on axis 1)
    t_ref:   (1, block_rows, 128)    integer targets (0 or 1)
    out_ref: (1, 1, 8, 128)          f32 per-(b, chunk) partial sum
    """
    j = pl.program_id(1)

    x0 = x_ref[0, 0].astype(jnp.float32)           # (block_rows, 128)
    x1 = x_ref[0, 1].astype(jnp.float32)           # (block_rows, 128)
    t = t_ref[0]                                   # (block_rows, 128) int
    # NOTE: targets outside {0, 1} are treated as class 0 (the PyTorch
    # reference would raise on the alpha gather); inputs are assumed binary.
    is_pos = t == 1

    # Binary focal loss on the logit difference (== log_softmax + gather, C=2).
    d = x1 - x0
    z = jnp.where(is_pos, d, -d)                   # (2t-1) * d, no multiply
    e = jnp.exp(-jnp.abs(z))                       # single exp, reused below
    inv_1pe = 1.0 / (1.0 + e)                      # exact reciprocal
    # log1p(e) without relying on a log1p lowering: for e < 1e-6, log1p(e)≈e.
    log1pe = jnp.where(e < 1e-6, e, jnp.log(1.0 + e))
    logpt = jnp.minimum(z, 0.0) - log1pe           # log_sigmoid(z)
    # u = 1 - pt = sigmoid(-z), built from e (no second exp):
    u = jnp.where(z >= 0.0, e, 1.0) * inv_1pe

    if gamma == 2:                                 # static Python branch
        focal = u * u                              # exact, VPU-only
    elif isinstance(gamma, int) and gamma >= 0:
        focal = lax.integer_pow(u, gamma)
    else:
        focal = u ** jnp.float32(gamma)

    # at = where(t==1, 1-alpha, alpha); fold the leading -1 into the select.
    at_neg = jnp.where(is_pos, alpha - 1.0, -alpha)
    loss = focal * logpt * at_neg                  # (block_rows, 128), >= 0

    def _store(v):
        # (block_rows,128) -> (block_rows//8, 8, 128) stays within (8,128)
        # tiles (layout-free); sum(axis=0) is pure VPU adds.
        out_ref[0, 0] = v.reshape(-1, _SUBLANE, _LANE).sum(axis=0)

    if needs_mask:
        last = pl.num_programs(1) - 1

        @pl.when(j != last)                        # interior chunks: no mask work
        def _():
            _store(loss)

        @pl.when(j == last)                        # only the last chunk has padding
        def _():
            row = lax.broadcasted_iota(jnp.int32, loss.shape, 0)
            lane = lax.broadcasted_iota(jnp.int32, loss.shape, 1)
            gidx = (j * block_rows + row) * _LANE + lane
            _store(jnp.where(gidx < hw, loss, 0.0))
    else:
        _store(loss)


def focal_loss(x_nchw, target, *, gamma=2, alpha=0.25, size_average=True,
               max_block_rows=4096):
    """Pallas implementation of FocalLoss.forward.

    x_nchw: (B, 2, H, W) logits (binary: C must be 2, matching alpha=[a, 1-a]).
    target: (B, H, W) (or any shape with B*H*W elems) class indices in {0, 1}.
    """
    B, C, H, W = x_nchw.shape
    assert C == 2, "binary focal loss (alpha=[a, 1-a]) requires C == 2"
    HW = H * W
    N = B * HW

    # Free reshapes of the contiguous NCHW layout (no transpose, no copy).
    x3 = x_nchw.reshape(B, 2, HW)
    t2 = target.reshape(B, HW)
    if not (jnp.issubdtype(t2.dtype, jnp.integer) or t2.dtype == jnp.bool_):
        t2 = t2.astype(jnp.int32)

    # Lane-dense layout needs HW to be a multiple of 128.
    lane_pad = (-HW) % _LANE
    if lane_pad:
        # TODO(synk): avoid this full-copy pad for 128-unaligned HW by keeping
        # the logits flat in HBM (memory_space=pl.ANY) and manually DMA-ing
        # block_rows*128-element slices into VMEM scratch.
        x3 = jnp.pad(x3, ((0, 0), (0, 0), (0, lane_pad)))
        t2 = jnp.pad(t2, ((0, 0), (0, lane_pad)))
    r = (HW + lane_pad) // _LANE

    x4 = x3.reshape(B, 2, r, _LANE)                # channel planes, lane-dense
    t3 = t2.reshape(B, r, _LANE)
    if r < _SUBLANE:
        # Tiny input: pad rows up to one (8,128) vreg (negligible copy).
        x4 = jnp.pad(x4, ((0, 0), (0, 0), (0, _SUBLANE - r), (0, 0)))
        t3 = jnp.pad(t3, ((0, 0), (0, _SUBLANE - r), (0, 0)))
        r = _SUBLANE

    # Balanced chunking; block_rows is a multiple of 8 and never exceeds r,
    # so any leftover rows form a standard partial edge block (no array pad).
    num_chunks = pl.cdiv(r, max_block_rows)
    block_rows = min(_round_up(pl.cdiv(r, num_chunks), _SUBLANE),
                     (r // _SUBLANE) * _SUBLANE)
    num_chunks = pl.cdiv(r, block_rows)
    needs_mask = (num_chunks * block_rows * _LANE) != HW

    # VMEM budget: double-buffered inputs + generous headroom for elementwise
    # f32 temporaries; stays well below v7x's 64 MiB physical VMEM.
    x_item = jnp.dtype(x4.dtype).itemsize
    t_item = jnp.dtype(t3.dtype).itemsize
    step_in_bytes = block_rows * _LANE * (2 * x_item + t_item)
    tmp_bytes = 10 * block_rows * _LANE * 4
    vmem_limit = int(min(48 * 1024 * 1024,
                         max(24 * 1024 * 1024,
                             2 * step_in_bytes + tmp_bytes + (2 << 20))))

    kernel = functools.partial(
        _focal_loss_kernel, gamma=gamma, alpha=float(alpha), hw=HW,
        block_rows=block_rows, needs_mask=needs_mask)

    partial_sums = pl.pallas_call(
        kernel,
        out_shape=jax.ShapeDtypeStruct((B, num_chunks, _SUBLANE, _LANE),
                                       jnp.float32),
        grid=(B, num_chunks),
        in_specs=[
            # logits: both channel planes of batch b, spatial chunk j
            pl.BlockSpec((1, 2, block_rows, _LANE), lambda b, j: (b, 0, j, 0)),
            # targets: batch b, spatial chunk j
            pl.BlockSpec((1, block_rows, _LANE), lambda b, j: (b, j, 0)),
        ],
        # Independent per-(batch, chunk) partial sums -> fully parallel grid.
        out_specs=pl.BlockSpec((1, 1, _SUBLANE, _LANE),
                               lambda b, j: (b, j, 0, 0)),
        compiler_params=pltpu.CompilerParams(
            dimension_semantics=("parallel", "parallel"),
            vmem_limit_bytes=vmem_limit),
    )(x4, t3)

    total = jnp.sum(partial_sums)                  # tiny final reduce in XLA
    if size_average:
        return total / jnp.float32(N)
    return total


def _focal_loss_ref(x_nchw, target, gamma=2, alpha=0.25):
    """Pure-JAX reference mirroring the PyTorch module, for sanity checking."""
    B, C, H, W = x_nchw.shape
    x2d = jnp.transpose(x_nchw.reshape(B, C, H * W), (0, 2, 1)).reshape(-1, C)
    t = target.reshape(-1).astype(jnp.int32)
    logp = jax.nn.log_softmax(x2d, axis=1)
    logpt = jnp.take_along_axis(logp, t[:, None], axis=1)[:, 0]
    pt = jnp.exp(logpt)
    alpha_vec = jnp.array([alpha, 1.0 - alpha], dtype=jnp.float32)
    at = alpha_vec[t]
    loss = -1.0 * (1.0 - pt) ** gamma * (logpt * at)
    return jnp.mean(loss)


if __name__ == "__main__":
    key = jax.random.PRNGKey(0)

    def _check(H, W, *, batch=2, max_block_rows=4096, salt=0):
        k1, k2 = jax.random.split(jax.random.fold_in(key, salt))
        x = jax.random.normal(k1, (batch, 2, H, W), dtype=jnp.float32)
        t = jax.random.randint(k2, (batch, H, W), 0, 2, dtype=jnp.int32)
        out = jax.block_until_ready(
            focal_loss(x, t, gamma=2, alpha=0.25,
                       max_block_rows=max_block_rows))
        ref = _focal_loss_ref(x, t, gamma=2, alpha=0.25)
        assert jnp.allclose(out, ref, rtol=1e-5, atol=1e-6), (H, W, out, ref)

    # Primary small case (binary map, C=2 matches alpha=[0.25, 0.75]).
    _check(16, 16)
    # Lane-unaligned spatial size (pad fallback path + masking).
    _check(10, 13, salt=1)
    # Multi-chunk grid with a partial final row block (zero-copy mask path).
    _check(10, 128, batch=1, max_block_rows=8, salt=2)

    print("KERNEL_OK")
</pallas_src>

<mosaic_0001>
module attributes {stable_mosaic.version = 11 : i64} {
  func.func @_focal_loss_kernel(%arg0: i32, %arg1: i32, %arg2: memref<1x2x8x128xf32, #tpu.memory_space<vmem>>, %arg3: memref<1x8x128xi32, #tpu.memory_space<vmem>>, %arg4: memref<1x1x8x128xf32, #tpu.memory_space<vmem>>) attributes {dimension_semantics = [#tpu.dimension_semantics<parallel>, #tpu.dimension_semantics<parallel>], iteration_bounds = array<i64: 2, 1>, scalar_prefetch = 0 : i64, scratch_operands = 0 : i64, tpu.core_type = #tpu.core_type<tc>, window_params = [{transform_indices = @transform_0, window_bounds = array<i64: 1, 2, 8, 128>}, {transform_indices = @transform_1, window_bounds = array<i64: 1, 8, 128>}, {transform_indices = @transform_2, window_bounds = array<i64: 1, 1, 8, 128>}]} {
    %c0 = arith.constant 0 : index
    %c0_0 = arith.constant 0 : index
    %c0_1 = arith.constant 0 : index
    %c0_2 = arith.constant 0 : index
    %0 = vector.load %arg2[%c0, %c0_0, %c0_1, %c0_2] : memref<1x2x8x128xf32, #tpu.memory_space<vmem>>, vector<1x1x8x128xf32>
    %1 = vector.shape_cast %0 : vector<1x1x8x128xf32> to vector<8x128xf32>
    %c0_3 = arith.constant 0 : index
    %c1 = arith.constant 1 : index
    %c0_4 = arith.constant 0 : index
    %c0_5 = arith.constant 0 : index
    %2 = vector.load %arg2[%c0_3, %c1, %c0_4, %c0_5] : memref<1x2x8x128xf32, #tpu.memory_space<vmem>>, vector<1x1x8x128xf32>
    %3 = vector.shape_cast %2 : vector<1x1x8x128xf32> to vector<8x128xf32>
    %c0_6 = arith.constant 0 : index
    %c0_7 = arith.constant 0 : index
    %c0_8 = arith.constant 0 : index
    %4 = vector.load %arg3[%c0_6, %c0_7, %c0_8] : memref<1x8x128xi32, #tpu.memory_space<vmem>>, vector<1x8x128xi32>
    %5 = vector.shape_cast %4 : vector<1x8x128xi32> to vector<8x128xi32>
    %c1_i32 = arith.constant 1 : i32
    %6 = vector.broadcast %c1_i32 : i32 to vector<8x128xi32>
    %7 = arith.cmpi eq, %5, %6 : vector<8x128xi32>
    %8 = arith.subf %3, %1 : vector<8x128xf32>
    %cst = arith.constant 0.000000e+00 : f32
    %9 = vector.broadcast %cst : f32 to vector<8x128xf32>
    %10 = arith.subf %9, %8 : vector<8x128xf32>
    %11 = arith.select %7, %8, %10 : vector<8x128xi1>, vector<8x128xf32>
    %12 = math.absf %11 : vector<8x128xf32>
    %cst_9 = arith.constant 0.000000e+00 : f32
    %13 = vector.broadcast %cst_9 : f32 to vector<8x128xf32>
    %14 = arith.subf %13, %12 : vector<8x128xf32>
    %15 = math.exp %14 : vector<8x128xf32>
    %cst_10 = arith.constant 1.000000e+00 : f32
    %16 = vector.broadcast %cst_10 : f32 to vector<8x128xf32>
    %17 = arith.addf %16, %15 : vector<8x128xf32>
    %cst_11 = arith.constant 1.000000e+00 : f32
    %18 = vector.broadcast %cst_11 : f32 to vector<8x128xf32>
    %19 = arith.divf %18, %17 : vector<8x128xf32>
    %cst_12 = arith.constant 9.99999997E-7 : f32
    %20 = vector.broadcast %cst_12 : f32 to vector<8x128xf32>
    %21 = arith.cmpf olt, %15, %20 : vector<8x128xf32>
    %cst_13 = arith.constant 1.000000e+00 : f32
    %22 = vector.broadcast %cst_13 : f32 to vector<8x128xf32>
    %23 = arith.addf %22, %15 : vector<8x128xf32>
    %24 = math.log %23 : vector<8x128xf32>
    %25 = arith.select %21, %15, %24 : vector<8x128xi1>, vector<8x128xf32>
    %cst_14 = arith.constant 0.000000e+00 : f32
    %26 = vector.broadcast %cst_14 : f32 to vector<8x128xf32>
    %27 = arith.minimumf %11, %26 : vector<8x128xf32>
    %28 = arith.subf %27, %25 : vector<8x128xf32>
    %cst_15 = arith.constant 0.000000e+00 : f32
    %29 = vector.broadcast %cst_15 : f32 to vector<8x128xf32>
    %30 = arith.cmpf oge, %11, %29 : vector<8x128xf32>
    %cst_16 = arith.constant 1.000000e+00 : f32
    %31 = vector.broadcast %cst_16 : f32 to vector<8x128xf32>
    %32 = arith.select %30, %15, %31 : vector<8x128xi1>, vector<8x128xf32>
    %33 = arith.mulf %32, %19 : vector<8x128xf32>
    %34 = arith.mulf %33, %33 : vector<8x128xf32>
    %cst_17 = arith.constant -7.500000e-01 : f32
    %cst_18 = arith.constant -2.500000e-01 : f32
    %35 = vector.broadcast %cst_17 : f32 to vector<8x128xf32>
    %36 = vector.broadcast %cst_18 : f32 to vector<8x128xf32>
    %37 = arith.select %7, %35, %36 : vector<8x128xi1>, vector<8x128xf32>
    %38 = arith.mulf %34, %28 : vector<8x128xf32>
    %39 = arith.mulf %38, %37 : vector<8x128xf32>
    %c0_i32 = arith.constant 0 : i32
    %40 = arith.cmpi ne, %arg1, %c0_i32 : i32
    %41 = arith.extui %40 : i1 to i32
    %c0_i32_19 = arith.constant 0 : i32
    %42 = arith.cmpi ne, %41, %c0_i32_19 : i32
    scf.if %42 {
      %46 = vector.shape_cast %39 : vector<8x128xf32> to vector<1x8x128xf32>
      %cst_22 = arith.constant dense<0.000000e+00> : vector<8x128xf32>
      %47 = vector.multi_reduction <add>, %46, %cst_22 [0] : vector<1x8x128xf32> to vector<8x128xf32>
      %c0_23 = arith.constant 0 : index
      %c0_24 = arith.constant 0 : index
      %c0_25 = arith.constant 0 : index
      %c0_26 = arith.constant 0 : index
      %48 = vector.load %arg4[%c0_23, %c0_24, %c0_25, %c0_26] : memref<1x1x8x128xf32, #tpu.memory_space<vmem>>, vector<1x1x8x128xf32>
      %49 = vector.shape_cast %48 : vector<1x1x8x128xf32> to vector<8x128xf32>
      %50 = vector.shape_cast %47 : vector<8x128xf32> to vector<1x1x8x128xf32>
      tpu.vector_store %arg4[%c0_23, %c0_24, %c0_25, %c0_26], %50 {strides = array<i32>} : memref<1x1x8x128xf32, #tpu.memory_space<vmem>>, vector<1x1x8x128xf32>,
    } else {
    }
    %c0_i32_20 = arith.constant 0 : i32
    %43 = arith.cmpi eq, %arg1, %c0_i32_20 : i32
    %44 = arith.extui %43 : i1 to i32
    %c0_i32_21 = arith.constant 0 : i32
    %45 = arith.cmpi ne, %44, %c0_i32_21 : i32
    scf.if %45 {
      %46 = tpu.iota {dimensions = array<i32: 0>} : vector<8x128xi32>
      %47 = tpu.iota {dimensions = array<i32: 1>} : vector<8x128xi32>
      %c8_i32 = arith.constant 8 : i32
      %48 = arith.muli %arg1, %c8_i32 : i32
      %49 = vector.broadcast %48 : i32 to vector<8x128xi32>
      %50 = arith.addi %49, %46 : vector<8x128xi32>
      %c128_i32 = arith.constant 128 : i32
      %51 = vector.broadcast %c128_i32 : i32 to vector<8x128xi32>
      %52 = arith.muli %50, %51 : vector<8x128xi32>
      %53 = arith.addi %52, %47 : vector<8x128xi32>
      %c256_i32 = arith.constant 256 : i32
      %54 = vector.broadcast %c256_i32 : i32 to vector<8x128xi32>
      %55 = arith.cmpi slt, %53, %54 : vector<8x128xi32>
      %cst_22 = arith.constant 0.000000e+00 : f32
      %56 = vector.broadcast %cst_22 : f32 to vector<8x128xf32>
      %57 = arith.select %55, %39, %56 : vector<8x128xi1>, vector<8x128xf32>
      %58 = vector.shape_cast %57 : vector<8x128xf32> to vector<1x8x128xf32>
      %cst_23 = arith.constant dense<0.000000e+00> : vector<8x128xf32>
      %59 = vector.multi_reduction <add>, %58, %cst_23 [0] : vector<1x8x128xf32> to vector<8x128xf32>
      %c0_24 = arith.constant 0 : index
      %c0_25 = arith.constant 0 : index
      %c0_26 = arith.constant 0 : index
      %c0_27 = arith.constant 0 : index
      %60 = vector.load %arg4[%c0_24, %c0_25, %c0_26, %c0_27] : memref<1x1x8x128xf32, #tpu.memory_space<vmem>>, vector<1x1x8x128xf32>
      %61 = vector.shape_cast %60 : vector<1x1x8x128xf32> to vector<8x128xf32>
      %62 = vector.shape_cast %59 : vector<8x128xf32> to vector<1x1x8x128xf32>
      tpu.vector_store %arg4[%c0_24, %c0_25, %c0_26, %c0_27], %62 {strides = array<i32>} : memref<1x1x8x128xf32, #tpu.memory_space<vmem>>, vector<1x1x8x128xf32>,
    } else {
    }
    return
  }
  func.func @transform_0(%arg0: i32, %arg1: i32) -> (i32, i32, i32, i32) {
    %c0_i32 = arith.constant 0 : i32
    %c0_i32_0 = arith.constant 0 : i32
    %c0_i32_1 = arith.constant 0 : i32
    return %arg0, %c0_i32, %arg1, %c0_i32_0 : i32, i32, i32, i32
  }
  func.func @transform_1(%arg0: i32, %arg1: i32) -> (i32, i32, i32) {
    %c0_i32 = arith.constant 0 : i32
    %c0_i32_0 = arith.constant 0 : i32
    return %arg0, %arg1, %c0_i32 : i32, i32, i32
  }
  func.func @transform_2(%arg0: i32, %arg1: i32) -> (i32, i32, i32, i32) {
    %c0_i32 = arith.constant 0 : i32
    %c0_i32_0 = arith.constant 0 : i32
    %c0_i32_1 = arith.constant 0 : i32
    return %arg0, %arg1, %c0_i32, %c0_i32_0 : i32, i32, i32, i32
  }
}

</mosaic_0001>

<llo_original>
// kernel: tpu_custom_call.1
$region0: #{tpu_custom_call.1}
  #allocation0 [shape = 'u32[]', space=smem, size = 0x4, offset = 0x4, fixed_abs, tag = 'smem constant byte address 0x4 - core index']
  #allocation1 [shape = 'u32[72,128]{1,0:T(1,128)}', space=vmem, size = 0x9000, scoped, tag = 'internal scratch']
  %s0 = inlined_call_operand.hbm [shape: f32[2,2,8,128], index: 0, kind: input, shape index: {}]
  %s1 = inlined_call_operand.hbm [shape: s32[2,8,128], index: 1, kind: input, shape index: {}]
  %s2 = inlined_call_operand.hbm [shape: f32[2,1,8,128], index: 2, kind: output, shape index: {}]
  %s3 = sld [smem:[#allocation0]]
  $region57: #{tpu_custom_call.1} parent=0
    _
  %s5 = ssub.s32 1, %s3
  %s6 = scalar_select 0, %s5, %s3
  $region1: #{tpu_custom_call.1} parent=0
    #allocation2 [shape = 'u8[16384]{0}', space=vmem, size = 0x4000, scoped, tag = 'input window, operand 0']
    #allocation3 [shape = 's32[2]{0}', space=sflag, size = 0x8, scoped, tag = 'scoped memory for tpu_custom_call.1']
    #allocation4 [shape = 's32[2]{0}', space=sflag, size = 0x8, scoped, tag = 'scoped memory for tpu_custom_call.1']
    #allocation5 [shape = 'u8[8192]{0}', space=vmem, size = 0x2000, scoped, tag = 'input window, operand 1']
    #allocation6 [shape = 's32[2]{0}', space=sflag, size = 0x8, scoped, tag = 'scoped memory for tpu_custom_call.1']
    #allocation7 [shape = 'u8[8192]{0}', space=vmem, size = 0x2000, scoped, tag = 'output window, operand 0']
    %7 = vsyncpa [#allocation3], 0
    %s8 = scalar_lea.sflag [#allocation3], 1
    %9 = vsyncpa %s8, 0
    %10 = vsyncpa [#allocation6], 0
    %s11 = scalar_lea.sflag [#allocation6], 1
    %12 = vsyncpa %s11, 0
    %13 = vsyncpa [#allocation4], 0
    %s14 = scalar_lea.sflag [#allocation4], 1
    %15 = vsyncpa %s14, 0
    loop: start=0, step=1, limit=4
    $region2: #{tpu_custom_call.1} parent=1 // loop_pre_header
      _
    $region3: #{tpu_custom_call.1} parent=1 // loop_header
      %s17 = sphi 0, %s21
      %p18 = scmp.ge.s32.totalorder %s17, 4
      %s24 = sphi 0, %s36
      %s25 = sphi 0, %s32
      %s26 = sphi 0, %s24
      %s27 = sphi 0, %s25
      %s28 = sphi 0, %s26
      %s29 = sphi 0, %s27
      %s41 = sphi 0, %s43
      %s44 = sphi 0, %s41
      %s45 = sphi 0, %s44
      %s61 = sphi 0, %s45
      %s69 = sphi 0, %s71
      %s72 = sphi 0, %s69
      %s73 = sphi 0, %s72
      %s89 = sphi 0, %s73
      %s97 = sphi 0, %s99
      %s100 = sphi 0, %s97
      %s101 = sphi 0, %s100
      %s117 = sphi 0, %s101
    $region4: #{tpu_custom_call.1} parent=1 // loop_header_branch
      %20 = sbr.rel (%p18) target = $region8
    $region5: #{tpu_custom_call.1} parent=1 // loop_body
      %s22 = ssub.s32 %s17, 1
      %s23 = ssub.s32 %s17, 2
      %s30 = sadd.s32 1, %s25
      %p31 = scmp.ge.s32.totalorder %s30, 1
      %s32 = scalar_select %p31, 0, %s30
      %s33 = sadd.s32 1, %s24
      %s34 = scalar_select %p31, %s33, %s24
      %p35 = scmp.ge.s32.totalorder %s34, 2
      %s36 = scalar_select %p35, 0, %s34
      %s37 = ssub.s32 %s24, %s36
      %s38 = ssub.s32 %s25, %s32
      %s39 = sor.u32 %s37, %s38
      %p40 = scmp.eq.s32.totalorder %s39, 0
      %s42 = sadd.s32 %s41, 1
      %s43 = scalar_select %p40, %s41, %s42
      %p46 = pneg %p40
      %p47 = scmp.eq.s32.totalorder %s17, 1
      %p48 = por %p46, %p47
      %p49 = scmp.ne.s32.totalorder %s41, %s44
      %p50 = scmp.eq.s32.totalorder %s17, 0
      %p51 = por %p49, %p50
      %p52 = scmp.ne.s32.totalorder %s41, %s44
      %p53 = scmp.eq.s32.totalorder %s22, 1
      %p54 = por %p52, %p53
      %p55 = scmp.ne.s32.totalorder %s44, %s45
      %p56 = scmp.eq.s32.totalorder %s22, 0
      %p57 = por %p55, %p56
      %p58 = scmp.ne.s32.totalorder %s44, %s45
      %p59 = scmp.eq.s32.totalorder %s23, 1
      %p60 = por %p58, %p59
      %p62 = scmp.ne.s32.totalorder %s45, %s61
      %p63 = scmp.eq.s32.totalorder %s23, 0
      %p64 = por %p62, %p63
      %s65 = ssub.s32 %s24, %s36
      %s66 = ssub.s32 %s25, %s32
      %s67 = sor.u32 %s65, %s66
      %p68 = scmp.eq.s32.totalorder %s67, 0
      %s70 = sadd.s32 %s69, 1
      %s71 = scalar_select %p68, %s69, %s70
      %p74 = pneg %p68
      %p75 = scmp.eq.s32.totalorder %s17, 1
      %p76 = por %p74, %p75
      %p77 = scmp.ne.s32.totalorder %s69, %s72
      %p78 = scmp.eq.s32.totalorder %s17, 0
      %p79 = por %p77, %p78
      %p80 = scmp.ne.s32.totalorder %s69, %s72
      %p81 = scmp.eq.s32.totalorder %s22, 1
      %p82 = por %p80, %p81
      %p83 = scmp.ne.s32.totalorder %s72, %s73
      %p84 = scmp.eq.s32.totalorder %s22, 0
      %p85 = por %p83, %p84
      %p86 = scmp.ne.s32.totalorder %s72, %s73
      %p87 = scmp.eq.s32.totalorder %s23, 1
      %p88 = por %p86, %p87
      %p90 = scmp.ne.s32.totalorder %s73, %s89
      %p91 = scmp.eq.s32.totalorder %s23, 0
      %p92 = por %p90, %p91
      %s93 = ssub.s32 %s24, %s36
      %s94 = ssub.s32 %s25, %s32
      %s95 = sor.u32 %s93, %s94
      %p96 = scmp.eq.s32.totalorder %s95, 0
      %s98 = sadd.s32 %s97, 1
      %s99 = scalar_select %p96, %s97, %s98
      %p102 = pneg %p96
      %p103 = scmp.eq.s32.totalorder %s17, 1
      %p104 = por %p102, %p103
      %p105 = scmp.ne.s32.totalorder %s97, %s100
      %p106 = scmp.eq.s32.totalorder %s17, 0
      %p107 = por %p105, %p106
      %p108 = scmp.ne.s32.totalorder %s97, %s100
      %p109 = scmp.eq.s32.totalorder %s22, 1
      %p110 = por %p108, %p109
      %p111 = scmp.ne.s32.totalorder %s100, %s101
      %p112 = scmp.eq.s32.totalorder %s22, 0
      %p113 = por %p111, %p112
      %p114 = scmp.ne.s32.totalorder %s100, %s101
      %p115 = scmp.eq.s32.totalorder %s23, 1
      %p116 = por %p114, %p115
      %p118 = scmp.ne.s32.totalorder %s101, %s117
      %p119 = scmp.eq.s32.totalorder %s23, 0
      %p120 = por %p118, %p119
      %p121 = scmp.le.s32.totalorder 1, %s17
      %p122 = scmp.lt.s32.totalorder %s17, 3
      %p123 = pnand %p121, %p122
      %p124 = pneg %p123
      // Predicated region
      $region9: #{tpu_custom_call.1} parent=5 // pred_check
        _
      $region10: #{tpu_custom_call.1} parent=5 // pred_check_branch
        %126 = sbr.rel (%p123) target = $region12
      $region11: #{tpu_custom_call.1} parent=5 // pred_region
        %s127 = ssub.s32 %s17, 1
      $region12: #{tpu_custom_call.1} parent=5 // pred_fallthru
        _
      %p128 = scmp.lt.s32.totalorder %s17, 2
      // Predicated region
      $region13: #{tpu_custom_call.1} parent=5 // pred_check
        %p129 = pneg %p128
      $region14: #{tpu_custom_call.1} parent=5 // pred_check_branch
        %131 = sbr.rel (%p129) target = $region16
      $region15: #{tpu_custom_call.1} parent=5 // pred_region
        // Predicated region
        $region17: #{tpu_custom_call.1} parent=15 // pred_check
          %p132 = pneg %p51
        $region18: #{tpu_custom_call.1} parent=15 // pred_check_branch
          %134 = sbr.rel (%p132) target = $region20
        $region19: #{tpu_custom_call.1} parent=15 // pred_region
          %s135 = sand.u32 %s41, 1
          %s136 = scalar_lea.sflag [#allocation3], %s135
          %s137 = sand.u32 %s41, 1
          %s138 = smul.addr %s137, 16
          %s139 = scalar_lea.vmem [#allocation2], %s138
          %141 = vsyncadd %s136, 0
          %s142 = smul.addr %s24, 2
          %s143 = sadd.s32 %s25, %s142
          %s144 = smul.addr %s143, 8
          %s145 = scalar_lea.hbm %s0, %s144
          %s146 = sshll.u32 %s145, 4
          %s147 = int_to_ptr.hbm [resolvable:$true] %s146
          %s148 = sshll.u32 %s139, 4
          %s149 = int_to_ptr.vmem [resolvable:$true] %s148
          %154 = dma.hbm_to_vmem [thread:$0]  %s147, 256, %s149, %s136, 128, 128, 8
        $region20: #{tpu_custom_call.1} parent=15 // pred_fallthru
          _
        // Predicated region
        $region21: #{tpu_custom_call.1} parent=15 // pred_check
          %p155 = pneg %p79
        $region22: #{tpu_custom_call.1} parent=15 // pred_check_branch
          %157 = sbr.rel (%p155) target = $region24
        $region23: #{tpu_custom_call.1} parent=15 // pred_region
          %s158 = sand.u32 %s69, 1
          %s159 = scalar_lea.sflag [#allocation6], %s158
          %s160 = sand.u32 %s69, 1
          %s161 = smul.addr %s160, 8
          %s162 = scalar_lea.vmem [#allocation5], %s161
          %164 = vsyncadd %s159, 0
          %s165 = sadd.s32 %s25, %s24
          %s166 = smul.addr %s165, 8
          %s167 = scalar_lea.hbm %s1, %s166
          %s169 = sshll.u32 %s167, 4
          %s170 = int_to_ptr.hbm [resolvable:$true] %s169
          %s171 = sshll.u32 %s162, 4
          %s172 = int_to_ptr.vmem [resolvable:$true] %s171
          %174 = dma.hbm_to_vmem [thread:$0]  %s170, 128, %s172, %s159
        $region24: #{tpu_custom_call.1} parent=15 // pred_fallthru
          _
      $region16: #{tpu_custom_call.1} parent=5 // pred_fallthru
        _
      %p175 = scmp.le.s32.totalorder 1, %s17
      %p176 = scmp.lt.s32.totalorder %s17, 3
      %p177 = pnand %p175, %p176
      %p178 = pneg %p177
      // Predicated region
      $region25: #{tpu_custom_call.1} parent=5 // pred_check
        _
      $region26: #{tpu_custom_call.1} parent=5 // pred_check_branch
        %180 = sbr.rel (%p177) target = $region28
      $region27: #{tpu_custom_call.1} parent=5 // pred_region
        %s181 = ssub.s32 %s17, 1
        %s182 = sand.u32 %s44, 1
        %s183 = scalar_lea.sflag [#allocation3], %s182
        %s184 = sand.u32 %s44, 1
        %s185 = smul.addr %s184, 16
        %s186 = scalar_lea.vmem [#allocation2], %s185
        // Predicated region
        $region29: #{tpu_custom_call.1} parent=27 // pred_check
          %p187 = pneg %p57
        $region30: #{tpu_custom_call.1} parent=27 // pred_check_branch
          %189 = sbr.rel (%p187) target = $region32
        $region31: #{tpu_custom_call.1} parent=27 // pred_region
          %191 = dma.done %s183, 256
        $region32: #{tpu_custom_call.1} parent=27 // pred_fallthru
          _
        %s192 = sand.u32 %s72, 1
        %s193 = scalar_lea.sflag [#allocation6], %s192
        %s194 = sand.u32 %s72, 1
        %s195 = smul.addr %s194, 8
        %s196 = scalar_lea.vmem [#allocation5], %s195
        // Predicated region
        $region33: #{tpu_custom_call.1} parent=27 // pred_check
          %p197 = pneg %p85
        $region34: #{tpu_custom_call.1} parent=27 // pred_check_branch
          %199 = sbr.rel (%p197) target = $region36
        $region35: #{tpu_custom_call.1} parent=27 // pred_region
          %201 = dma.done %s193, 128
        $region36: #{tpu_custom_call.1} parent=27 // pred_fallthru
          _
        %s202 = sand.u32 %s44, 1
        %s203 = scalar_lea.sflag [#allocation3], %s202
        %s204 = sand.u32 %s44, 1
        %s205 = smul.addr %s204, 16
        %s206 = scalar_lea.vmem [#allocation2], %s205
        %p207 = pneg %p57
        %p208 = pneg %p54
        %s209 = sand.u32 %s72, 1
        %s210 = scalar_lea.sflag [#allocation6], %s209
        %s211 = sand.u32 %s72, 1
        %s212 = smul.addr %s211, 8
        %s213 = scalar_lea.vmem [#allocation5], %s212
        %p214 = pneg %p85
        %p215 = pneg %p82
        %p216 = pneg %p113
        %p217 = pneg %p110
        %s218 = sand.u32 %s100, 1
        %s219 = scalar_lea.sflag [#allocation4], %s218
        %s220 = sand.u32 %s100, 1
        %s221 = smul.addr %s220, 8
        %s222 = scalar_lea.vmem [#allocation7], %s221
        %v223 = vld [vmem:[%s186] sm:$0xff]
        %s224 = scalar_lea.vmem %s186, 8 [#allocation2]
        %v225 = vld [vmem:[%s224] sm:$0xff]
        %v226 = vld [vmem:[%s196] sm:$0xff]
        %vm227 = vcmp.eq.s32.totalorder %v226, 1
        %v228 = vsub.f32 %v225, %v223
        %v229 = vsub.f32 0.0, %v228
        %v230 = vsel %vm227, %v228, %v229
        %v231 = vand.u32 2147483647, %v230
        %v232 = vsub.f32 0.0, %v231
        %v233 = vmul.f32 %v232, 1.442695
        %v234 = vpow.pop %v233
        %v235 = vadd.f32 %v234, 1.0
        %v236 = vrcp.pop %v235
        %v237 = vmul.f32 %v235, %v236
        %v238 = vsub.f32 1.0, %v237
        %v239 = vmul.f32 %v236, %v238
        %v240 = vadd.f32 %v236, %v239
        %vm241 = vweird.f32 %v235
        %vm242 = vweird.f32 %v236
        %vm243 = vmor %vm241, %vm242
        %v244 = vsel %vm243, %v236, %v240
        %v245 = vand.u32 2147483647, %v235
        %vm246 = vcmp.eq.f32.partialorder %v245, 8.507059e+37
        %v247 = vand.u32 %v235, 2147483648
        %v248 = vor.u32 1.1754944e-38, %v247
        %v249 = vsel %vm246, %v248, %v244
        %v250 = vmul.f32 1.0, %v249
        %vm251 = vcmp.lt.f32.partialorder %v234, 1e-06
        %v252 = vlog2.pop %v235
        %v253 = vmul.f32 %v252, 0.6931472
        %v254 = vsel %vm251, %v234, %v253
        %v255 = vmin.f32 %v230, 0.0
        %v256 = vsub.f32 %v255, %v254
        %vm257 = vcmp.ge.f32.partialorder %v230, 0.0
        %v258 = vsel %vm257, %v234, 1.0
        %v259 = vmul.f32 %v258, %v250
        %v260 = vmul.f32 %v259, %v259
        %v261 = vsel %vm227, -0.75, -0.25
        %v262 = vmul.f32 %v260, %v256
        %v263 = vmul.f32 %v262, %v261
        %p264 = scmp.ne.s32.totalorder %s27, 0
        // Predicated region
        $region37: #{tpu_custom_call.1} parent=27 // pred_check
          %p265 = pneg %p264
        $region38: #{tpu_custom_call.1} parent=27 // pred_check_branch
          %267 = sbr.rel (%p265) target = $region40
        $region39: #{tpu_custom_call.1} parent=27 // pred_region
          %v268 = vadd.f32 %v263, 0.0
          %269 = vst [vmem:[%s222] sm:$0xff] %v268
        $region40: #{tpu_custom_call.1} parent=27 // pred_fallthru
          _
        %p270 = scmp.eq.s32.totalorder %s27, 0
        // Predicated region
        $region41: #{tpu_custom_call.1} parent=27 // pred_check
          %p271 = pneg %p270
        $region42: #{tpu_custom_call.1} parent=27 // pred_check_branch
          %273 = sbr.rel (%p271) target = $region44
        $region43: #{tpu_custom_call.1} parent=27 // pred_region
          %v274 = vlaneseq
          %v275 = vshrl.u32 %v274, 7
          %v276 = vlaneseq
          %v277 = vand.u32 %v276, 127
          %s278 = smul.u32 %s27, 8
          %v279 = vstv %s278
          %v280 = vadd.s32 %v279, %v275
          %v281 = vmul.u32 %v280, 128
          %v282 = vadd.s32 %v281, %v277
          %vm283 = vcmp.lt.s32.totalorder %v282, 256
          %v284 = vsel %vm283, %v263, 0.0
          %v285 = vadd.f32 %v284, 0.0
          %286 = vst [vmem:[%s222] sm:$0xff] %v285
        $region44: #{tpu_custom_call.1} parent=27 // pred_fallthru
          _
        %s287 = sand.u32 %s100, 1
        %s288 = scalar_lea.sflag [#allocation4], %s287
        %s289 = sand.u32 %s100, 1
        %s290 = smul.addr %s289, 8
        %s291 = scalar_lea.vmem [#allocation7], %s290
        // Predicated region
        $region45: #{tpu_custom_call.1} parent=27 // pred_check
          %p292 = pneg %p110
        $region46: #{tpu_custom_call.1} parent=27 // pred_check_branch
          %294 = sbr.rel (%p292) target = $region48
        $region47: #{tpu_custom_call.1} parent=27 // pred_region
          %296 = vsyncadd %s288, 0
          %s297 = sadd.s32 %s27, %s26
          %s298 = smul.addr %s297, 8
          %s299 = scalar_lea.hbm %s2, %s298
          %s301 = sshll.u32 %s291, 4
          %s302 = int_to_ptr.vmem [resolvable:$true] %s301
          %s303 = sshll.u32 %s299, 4
          %s304 = int_to_ptr.hbm [resolvable:$true] %s303
          %306 = dma.vmem_to_hbm [thread:$0]  %s302, 128, %s304, %s288
        $region48: #{tpu_custom_call.1} parent=27 // pred_fallthru
          _
      $region28: #{tpu_custom_call.1} parent=5 // pred_fallthru
        _
      %p307 = scmp.le.s32.totalorder 2, %s17
      // Predicated region
      $region49: #{tpu_custom_call.1} parent=5 // pred_check
        %p308 = pneg %p307
      $region50: #{tpu_custom_call.1} parent=5 // pred_check_branch
        %310 = sbr.rel (%p308) target = $region52
      $region51: #{tpu_custom_call.1} parent=5 // pred_region
        %s311 = ssub.s32 %s17, 2
        // Predicated region
        $region53: #{tpu_custom_call.1} parent=51 // pred_check
          %p312 = pneg %p116
        $region54: #{tpu_custom_call.1} parent=51 // pred_check_branch
          %314 = sbr.rel (%p312) target = $region56
        $region55: #{tpu_custom_call.1} parent=51 // pred_region
          %s315 = sand.u32 %s101, 1
          %s316 = scalar_lea.sflag [#allocation4], %s315
          %s317 = sand.u32 %s101, 1
          %s318 = smul.addr %s317, 8
          %s319 = scalar_lea.vmem [#allocation7], %s318
          %321 = dma.done %s316, 128
        $region56: #{tpu_custom_call.1} parent=51 // pred_fallthru
          _
      $region52: #{tpu_custom_call.1} parent=5 // pred_fallthru
        _
    $region6: #{tpu_custom_call.1} parent=1 // loop_footer
      %s21 = sadd.s32 1, %s17
    $region7: #{tpu_custom_call.1} parent=1 // loop_footer_branch
      %16 = sbr.rel target = $region3
    $region8: #{tpu_custom_call.1} parent=1 // loop_exit
      _
    %322 = vsyncpa [#allocation3], 1
    %s323 = scalar_lea.sflag [#allocation3], 1
    %324 = vsyncpa %s323, 1
    %325 = vsyncpa [#allocation6], 1
    %s326 = scalar_lea.sflag [#allocation6], 1
    %327 = vsyncpa %s326, 1
    %328 = vsyncpa [#allocation4], 1
    %s329 = scalar_lea.sflag [#allocation4], 1
    %330 = vsyncpa %s329, 1

</llo_original>
